<compile_context>
chip_gen: v7x
topology: tpu7x:2x2x1
jax: 0.10.0
libtpu: 0.0.40
codegen_flags: <defaults>
</compile_context>

<pallas_src>
import jax
import jax.numpy as jnp
from jax.experimental import pallas as pl
from jax.experimental.pallas import tpu as pltpu


def neuralnet_kernel(x_ref, w2_ref, b2_ref, o_ref):
    x = x_ref[...]                   # [B, D] f32 — single (8,128) padded tile
    w2 = w2_ref[...]                 # [1, D] f32 — broadcasts over rows
    b2 = b2_ref[0]                   # scalar bias, read from SMEM

    # linear2(x) + sigmoid: VPU elementwise multiply + lane reduction — no MXU.
    z = jnp.sum(x * w2, axis=-1, keepdims=True) + b2      # [B, 1]
    o_ref[...] = jax.nn.sigmoid(z)                         # sigmoid -> EUP


def neuralnet_forward(x, w2, b2):
    """x: [B, D] f32, w2: [1, H] with H == D, b2: [1] f32  ->  [B, 1] f32."""
    B, D = x.shape
    assert w2.shape == (1, D), "module requires input_size == hidden_size"
    b2s = b2.reshape(1)

    return pl.pallas_call(
        neuralnet_kernel,
        out_shape=jax.ShapeDtypeStruct((B, 1), jnp.float32),
        in_specs=[
            pl.BlockSpec(memory_space=pltpu.MemorySpace.VMEM),   # x   [B, D]
            pl.BlockSpec(memory_space=pltpu.MemorySpace.VMEM),   # W2  [1, D]
            pl.BlockSpec(memory_space=pltpu.MemorySpace.SMEM),   # b2  [1]
        ],
        out_specs=pl.BlockSpec(memory_space=pltpu.MemorySpace.VMEM),
        cost_estimate=pl.CostEstimate(
            flops=2 * B * D,
            transcendentals=B,
            bytes_accessed=4 * (B * D + D + B + 1),
        ),
    )(x, w2, b2s)


if __name__ == "__main__":
    B = 8
    input_size = 32
    hidden_size = 32   # must equal input_size for linear2(x) to be shape-valid

    key = jax.random.PRNGKey(0)
    kx, k1, kb1, k2, kb2 = jax.random.split(key, 5)

    # PyTorch-style uniform(-1/sqrt(fan_in), 1/sqrt(fan_in)) init.
    bound1 = 1.0 / jnp.sqrt(jnp.float32(input_size))
    bound2 = 1.0 / jnp.sqrt(jnp.float32(hidden_size))
    x = jax.random.normal(kx, (B, input_size), dtype=jnp.float32)
    # linear1's parameters exist on the module but its output is dead in forward();
    # constructed for fidelity and deliberately NOT passed to the kernel.
    w1 = jax.random.uniform(k1, (hidden_size, input_size), jnp.float32, -bound1, bound1)
    b1 = jax.random.uniform(kb1, (hidden_size,), jnp.float32, -bound1, bound1)
    w2 = jax.random.uniform(k2, (1, hidden_size), jnp.float32, -bound2, bound2)
    b2 = jax.random.uniform(kb2, (1,), jnp.float32, -bound2, bound2)
    del w1, b1  # dead per the PyTorch forward; no DMA, no compute

    out = neuralnet_forward(x, w2, b2)
    jax.block_until_ready(out)

    # Reference check in plain JAX (same semantics as the PyTorch forward).
    ref = jax.nn.sigmoid(x @ w2.T + b2)          # [B, 1]
    assert out.shape == (B, 1)
    assert jnp.allclose(out, ref, atol=1e-5), "mismatch vs reference"

    print("KERNEL_OK")
</pallas_src>

<mosaic_0001>
module attributes {stable_mosaic.version = 11 : i64} {
  func.func @neuralnet_kernel(%arg0: memref<8x32xf32, #tpu.memory_space<vmem>>, %arg1: memref<1x32xf32, #tpu.memory_space<vmem>>, %arg2: memref<1xf32, #tpu.memory_space<smem>>, %arg3: memref<8x1xf32, #tpu.memory_space<vmem>>) attributes {dimension_semantics = [], scalar_prefetch = 0 : i64, scratch_operands = 0 : i64, tpu.core_type = #tpu.core_type<tc>} {
    %c0 = arith.constant 0 : index
    %c0_0 = arith.constant 0 : index
    %0 = vector.load %arg0[%c0, %c0_0] : memref<8x32xf32, #tpu.memory_space<vmem>>, vector<8x32xf32>
    %c0_1 = arith.constant 0 : index
    %c0_2 = arith.constant 0 : index
    %1 = vector.load %arg1[%c0_1, %c0_2] : memref<1x32xf32, #tpu.memory_space<vmem>>, vector<1x32xf32>
    %c0_3 = arith.constant 0 : index
    %2 = memref.load %arg2[%c0_3] : memref<1xf32, #tpu.memory_space<smem>>
    %3 = vector.broadcast %1 : vector<1x32xf32> to vector<8x32xf32>
    %4 = arith.mulf %0, %3 : vector<8x32xf32>
    %cst = arith.constant dense<0.000000e+00> : vector<8xf32>
    %5 = vector.multi_reduction <add>, %4, %cst [1] : vector<8x32xf32> to vector<8xf32>
    %6 = vector.shape_cast %5 : vector<8xf32> to vector<8x1xf32>
    %7 = vector.broadcast %2 : f32 to vector<8x1xf32>
    %8 = arith.addf %6, %7 : vector<8x1xf32>
    %9 = arith.negf %8 : vector<8x1xf32>
    %10 = math.exp %9 : vector<8x1xf32>
    %cst_4 = arith.constant 1.000000e+00 : f32
    %11 = vector.broadcast %cst_4 : f32 to vector<8x1xf32>
    %12 = arith.addf %11, %10 : vector<8x1xf32>
    %13 = arith.divf %11, %12 : vector<8x1xf32>
    %c0_5 = arith.constant 0 : index
    %c0_6 = arith.constant 0 : index
    %14 = vector.load %arg3[%c0_5, %c0_6] : memref<8x1xf32, #tpu.memory_space<vmem>>, vector<8x1xf32>
    tpu.vector_store %arg3[%c0_5, %c0_6], %13 {strides = array<i32>} : memref<8x1xf32, #tpu.memory_space<vmem>>, vector<8x1xf32>,
    return
  }
}

</mosaic_0001>

<llo_original>
// kernel: tpu_custom_call.1
$region0: #{tpu_custom_call.1}
  #allocation0 [shape = 'u32[]', space=smem, size = 0x4, offset = 0x4, fixed_abs, tag = 'smem constant byte address 0x4 - core index']
  #allocation1 [shape = 'u32[144,128]{1,0:T(1,128)}', space=vmem, size = 0x12000, scoped, tag = 'internal scratch']
  #allocation2 [shape = 'f32[1]{0:T(128)S(6)}', space=smem, size = 0x200, scoped, tag = 'scoped memory for tpu_custom_call.1']
  %s0 = inlined_call_operand.hbm [shape: f32[8,32], index: 0, kind: input, shape index: {}]
  %s1 = inlined_call_operand.vmem [shape: f32[1,32], index: 1, kind: input, shape index: {}]
  %s2 = inlined_call_operand.<no memory space> [shape: f32[1], index: 2, kind: input, shape index: {}]
  %s3 = inlined_call_operand.vmem [shape: f32[8,1], index: 3, kind: output, shape index: {}]
  %s4 = sld [smem:[#allocation0]]
  $region26: #{tpu_custom_call.1} parent=0
    _
  %s6 = ssub.s32 1, %s4
  %s7 = scalar_select 0, %s6, %s4
  %8 = sst [smem:[#allocation2]] %s2
  $region1: #{tpu_custom_call.1} parent=0
    #allocation3 [shape = 'u8[4096]{0}', space=vmem, size = 0x1000, scoped, tag = 'input window, operand 0, single buffered']
    #allocation4 [shape = 's32[1]{0}', space=sflag, size = 0x4, scoped, tag = 'scoped memory for tpu_custom_call.1']
    %9 = vsyncpa [#allocation4], 0
    // Predicated region
    $region2: #{tpu_custom_call.1} parent=1 // pred_check
      _
    $region3: #{tpu_custom_call.1} parent=1 // pred_check_branch
      %11 = sbr.rel (0) target = $region5
    $region4: #{tpu_custom_call.1} parent=1 // pred_region
      %s13 = ssub.s32 128, 128
      %14 = vsyncadd [#allocation4], %s13
      %s16 = sshll.u32 [#allocation3], 4
      %s17 = int_to_ptr.vmem [resolvable:$true] %s16
      %19 = dma.hbm_to_vmem [thread:$0]  %s0, 128, %s17, [#allocation4]
    $region5: #{tpu_custom_call.1} parent=1 // pred_fallthru
      _
    // Predicated region
    $region6: #{tpu_custom_call.1} parent=1 // pred_check
      _
    $region7: #{tpu_custom_call.1} parent=1 // pred_check_branch
      %21 = sbr.rel (0) target = $region9
    $region8: #{tpu_custom_call.1} parent=1 // pred_region
      _
    $region9: #{tpu_custom_call.1} parent=1 // pred_fallthru
      _
    // Predicated region
    $region10: #{tpu_custom_call.1} parent=1 // pred_check
      _
    $region11: #{tpu_custom_call.1} parent=1 // pred_check_branch
      %23 = sbr.rel (0) target = $region13
    $region12: #{tpu_custom_call.1} parent=1 // pred_region
      _
    $region13: #{tpu_custom_call.1} parent=1 // pred_fallthru
      _
    // Predicated region
    $region14: #{tpu_custom_call.1} parent=1 // pred_check
      _
    $region15: #{tpu_custom_call.1} parent=1 // pred_check_branch
      %25 = sbr.rel (0) target = $region17
    $region16: #{tpu_custom_call.1} parent=1 // pred_region
      %26 = dma.done [#allocation4], 128
    $region17: #{tpu_custom_call.1} parent=1 // pred_fallthru
      _
    %v27 = vld [vmem:[#allocation3] sm:$0xff]
    %v28 = vld [vmem:[%s1] sm:$0x1]
    %s29 = sld [smem:[#allocation2]]
    %v31 = vlaneseq
    %v32 = vshrl.u32 %v31, 7
    %v33 = vsub.s32 0, %v32
    %v34 = vrot.slane %v28, %v33
    %v36 = vmul.f32 %v27, %v34
    %vm37 = vcmask 261120
    %v38 = vsel %vm37, %v36, 0.0
    %39 = vadd.xlane.f32.xlu0 %v38
    %v40 = vpop.xlane.xlu0 %39
    %v41 = vstv %s29
    %v42 = vadd.f32 %v40, %v41
    %v43 = vxor.u32 %v42, 2147483648
    %v44 = vmul.f32 %v43, 1.442695
    %v45 = vpow.pop %v44
    %v46 = vadd.f32 %v45, 1.0
    %v47 = vrcp.pop %v46
    %v48 = vmul.f32 1.0, %v47
    %vm49 = vcmask 7168
    %50 = vst.msk [vmem:[%s3] sm:$0xff] %vm49, %v48
    // Predicated region
    $region18: #{tpu_custom_call.1} parent=1 // pred_check
      _
    $region19: #{tpu_custom_call.1} parent=1 // pred_check_branch
      %52 = sbr.rel (0) target = $region21
    $region20: #{tpu_custom_call.1} parent=1 // pred_region
      _
    $region21: #{tpu_custom_call.1} parent=1 // pred_fallthru
      _
    // Predicated region
    $region22: #{tpu_custom_call.1} parent=1 // pred_check
      _
    $region23: #{tpu_custom_call.1} parent=1 // pred_check_branch
      %54 = sbr.rel (0) target = $region25
    $region24: #{tpu_custom_call.1} parent=1 // pred_region
      _
    $region25: #{tpu_custom_call.1} parent=1 // pred_fallthru
      _
    %55 = vsyncpa [#allocation4], 1

</llo_original>
